<compile_context>
chip_gen: v7x
topology: tpu7x:2x2x1
jax: 0.10.0
libtpu: 0.0.40
codegen_flags: <defaults>
</compile_context>

<pallas_src>
import jax
import jax.numpy as jnp
from jax.experimental import pallas as pl
from jax.experimental.pallas import tpu as pltpu

_LANE = 128


def _round_up(n, m):
    return (n + m - 1) // m * m


def _make_mlp_kernel(mxu_dtype=None):
    """Fused 4-layer MLP kernel, transposed layout: activations are
    (features, batch) so batch maps to the 128-lane axis."""

    def _dot(w, a):
        # Weights are pre-cast in the wrapper; only the activation may need a
        # cast here (no-op when it already is mxu_dtype, e.g. the bf16 x tile).
        if mxu_dtype is not None:
            a = a.astype(mxu_dtype)
        return jnp.dot(w, a, preferred_element_type=jnp.float32)

    def kernel(xT_ref, w1_ref, b1_ref, w2_ref, b2_ref,
               w3_ref, b3_ref, w4_ref, b4_ref, o_ref):
        x = xT_ref[...]                                       # (n_feature, tb)
        # Bias-add / ReLU stay f32 (v5e VPU has no bf16 path; VALU has slack).
        h = jnp.maximum(_dot(w1_ref[...], x) + b1_ref[...], 0.0)
        h = jnp.maximum(_dot(w2_ref[...], h) + b2_ref[...], 0.0)
        h = jnp.maximum(_dot(w3_ref[...], h) + b3_ref[...], 0.0)
        y = _dot(w4_ref[...], h) + b4_ref[...]                # (n_out, tb)
        o_ref[...] = y.astype(o_ref.dtype)

    return kernel


def net_forward(x, params, *, block_batch=2048, mxu_dtype=None):
    """Run the fused 4-layer MLP Pallas kernel.

    x: (B, n_feature) float32
    params: dict with w1..w4 of shape (out_features, in_features) (PyTorch
            nn.Linear layout) and b1..b4 of shape (out_features, 1).
    block_batch: target batch-tile size (rounded to 128 lanes; sweepable
                 1024/2048/4096 for large B).
    mxu_dtype: optional dtype (e.g. jnp.bfloat16) for matmul operands and the
               x stream; accumulation is always float32.  Valid on v5e too.
    """
    w1, b1 = params["w1"], params["b1"]
    w2, b2 = params["w2"], params["b2"]
    w3, b3 = params["w3"], params["b3"]
    w4, b4 = params["w4"], params["b4"]

    B, n_feature = x.shape
    n_out = w4.shape[0]
    out_dtype = x.dtype

    # Transposed layout: batch on the lane axis.
    xT = x.T                                                  # (n_feature, B)
    if mxu_dtype is not None:
        # Cast once in the wrapper: halves the dominant x HBM stream and avoids
        # re-casting the VMEM-resident weights on every grid step.
        xT = xT.astype(mxu_dtype)
        w1, w2, w3, w4 = (w.astype(mxu_dtype) for w in (w1, w2, w3, w4))
        # Biases stay f32 so bias-add / ReLU remain f32.

    # Batch tile: multiple of 128 lanes, capped by block_batch; ensure >= 2
    # tiles whenever the batch allows so the "parallel" axis feeds both v7x
    # TensorCores (single tile is fine for tiny batches).
    tb = min(_round_up(block_batch, _LANE), _round_up(B, _LANE))
    if B > _LANE and _round_up(B, tb) // tb < 2:
        tb = _round_up(pl.cdiv(_round_up(B, _LANE), 2), _LANE)
    b_pad = _round_up(B, tb)
    if b_pad != B:
        xT = jnp.pad(xT, ((0, 0), (0, b_pad - B)))
    num_tiles = b_pad // tb

    def _tile_map(i):        # batch-tiled operands (x, out): column-block i
        return (0, i)

    def _resident_map(i):    # weights/biases: constant block -> VMEM-resident
        return (0, 0)

    def _full(a):
        return pl.BlockSpec(a.shape, _resident_map)

    out = pl.pallas_call(
        _make_mlp_kernel(mxu_dtype),
        out_shape=jax.ShapeDtypeStruct((n_out, b_pad), out_dtype),
        grid=(num_tiles,),
        in_specs=[
            pl.BlockSpec((n_feature, tb), _tile_map),
            _full(w1), _full(b1),
            _full(w2), _full(b2),
            _full(w3), _full(b3),
            _full(w4), _full(b4),
        ],
        out_specs=pl.BlockSpec((n_out, tb), _tile_map),
        compiler_params=pltpu.CompilerParams(
            dimension_semantics=("parallel",),   # shard batch across TCs on v7x
        ),
    )(xT, w1, b1, w2, b2, w3, b3, w4, b4)

    # (n_out, b_pad) -> (B, n_out); tiny slabs, cheap wrapper transpose.
    return out[:, :B].T


def init_params(key, n_feature, n_hidden, n_output):
    """Deterministic init matching torch.nn.Linear's default:
    U(-1/sqrt(fan_in), 1/sqrt(fan_in)); weights stored (out, in), biases (out, 1)."""
    dims = [(n_feature, n_hidden), (n_hidden, n_hidden),
            (n_hidden, n_hidden), (n_hidden, n_output)]
    params = {}
    for i, (fan_in, fan_out) in enumerate(dims, start=1):
        key, kw, kb = jax.random.split(key, 3)
        bound = 1.0 / jnp.sqrt(jnp.float32(fan_in))
        params[f"w{i}"] = jax.random.uniform(
            kw, (fan_out, fan_in), jnp.float32, -bound, bound)
        params[f"b{i}"] = jax.random.uniform(
            kb, (fan_out, 1), jnp.float32, -bound, bound)
    return params


def _reference(x, params):
    h = jnp.maximum(x @ params["w1"].T + params["b1"][:, 0], 0.0)
    h = jnp.maximum(h @ params["w2"].T + params["b2"][:, 0], 0.0)
    h = jnp.maximum(h @ params["w3"].T + params["b3"][:, 0], 0.0)
    return h @ params["w4"].T + params["b4"][:, 0]


if __name__ == "__main__":
    n_feature, n_hidden, n_output = 16, 32, 8

    key = jax.random.PRNGKey(0)
    key, kx = jax.random.split(key)
    params = init_params(key, n_feature, n_hidden, n_output)

    # 1) Small-batch parity test at the module-implied shapes (single grid step).
    x_small = jax.random.normal(kx, (8, n_feature), jnp.float32)
    y_small = jax.block_until_ready(net_forward(x_small, params))
    y_small_ref = _reference(x_small, params)
    assert y_small.shape == (8, n_output)
    assert jnp.allclose(y_small, y_small_ref, atol=1e-4, rtol=1e-4)

    # 2) Larger batch exercises the multi-tile batch grid (>=2 lane-dense tiles,
    #    resident weights, natural-width output, ragged-batch pad).
    key, kb = jax.random.split(key)
    x_big = jax.random.normal(kb, (1000, n_feature), jnp.float32)
    y_big = jax.block_until_ready(net_forward(x_big, params))
    y_big_ref = _reference(x_big, params)
    assert y_big.shape == (1000, n_output)
    assert jnp.allclose(y_big, y_big_ref, atol=1e-4, rtol=1e-4)

    # 3) bf16-MXU path (valid on v5e/v6e/v7x); bf16 x stream + weights,
    #    f32 accumulation, looser tolerance for expected precision loss.
    y_bf16 = jax.block_until_ready(
        net_forward(x_big, params, mxu_dtype=jnp.bfloat16))
    assert y_bf16.shape == (1000, n_output)
    assert jnp.allclose(y_bf16, y_big_ref, atol=5e-2, rtol=5e-2)

    print("KERNEL_OK")
</pallas_src>

<mosaic_0001>
module attributes {stable_mosaic.version = 11 : i64} {
  func.func @kernel(%arg0: i32, %arg1: memref<16x128xf32, #tpu.memory_space<vmem>>, %arg2: memref<32x16xf32, #tpu.memory_space<vmem>>, %arg3: memref<32x1xf32, #tpu.memory_space<vmem>>, %arg4: memref<32x32xf32, #tpu.memory_space<vmem>>, %arg5: memref<32x1xf32, #tpu.memory_space<vmem>>, %arg6: memref<32x32xf32, #tpu.memory_space<vmem>>, %arg7: memref<32x1xf32, #tpu.memory_space<vmem>>, %arg8: memref<8x32xf32, #tpu.memory_space<vmem>>, %arg9: memref<8x1xf32, #tpu.memory_space<vmem>>, %arg10: memref<8x128xf32, #tpu.memory_space<vmem>>) attributes {dimension_semantics = [#tpu.dimension_semantics<parallel>], iteration_bounds = array<i64: 1>, scalar_prefetch = 0 : i64, scratch_operands = 0 : i64, tpu.core_type = #tpu.core_type<tc>, window_params = [{transform_indices = @transform_0, window_bounds = array<i64: 16, 128>}, {pipeline_mode = #tpu.pipeline_mode<synchronous>, transform_indices = @transform_1, window_bounds = array<i64: 32, 16>}, {pipeline_mode = #tpu.pipeline_mode<synchronous>, transform_indices = @transform_2, window_bounds = array<i64: 32, 1>}, {pipeline_mode = #tpu.pipeline_mode<synchronous>, transform_indices = @transform_3, window_bounds = array<i64: 32, 32>}, {pipeline_mode = #tpu.pipeline_mode<synchronous>, transform_indices = @transform_4, window_bounds = array<i64: 32, 1>}, {pipeline_mode = #tpu.pipeline_mode<synchronous>, transform_indices = @transform_5, window_bounds = array<i64: 32, 32>}, {pipeline_mode = #tpu.pipeline_mode<synchronous>, transform_indices = @transform_6, window_bounds = array<i64: 32, 1>}, {pipeline_mode = #tpu.pipeline_mode<synchronous>, transform_indices = @transform_7, window_bounds = array<i64: 8, 32>}, {pipeline_mode = #tpu.pipeline_mode<synchronous>, transform_indices = @transform_8, window_bounds = array<i64: 8, 1>}, {transform_indices = @transform_9, window_bounds = array<i64: 8, 128>}]} {
    %c0 = arith.constant 0 : index
    %c0_0 = arith.constant 0 : index
    %0 = vector.load %arg1[%c0, %c0_0] : memref<16x128xf32, #tpu.memory_space<vmem>>, vector<16x128xf32>
    %c0_1 = arith.constant 0 : index
    %c0_2 = arith.constant 0 : index
    %1 = vector.load %arg2[%c0_1, %c0_2] : memref<32x16xf32, #tpu.memory_space<vmem>>, vector<32x16xf32>
    %cst = arith.constant dense<0.000000e+00> : vector<32x128xf32>
    %2 = tpu.matmul %1, %0, %cst {dimension_numbers = #tpu.dot_dimension_numbers<[1], [0], [0], [1], [0, 0, 1, 1], [], []>} : vector<32x16xf32>, vector<16x128xf32>, vector<32x128xf32> -> vector<32x128xf32>
    %c0_3 = arith.constant 0 : index
    %c0_4 = arith.constant 0 : index
    %3 = vector.load %arg3[%c0_3, %c0_4] : memref<32x1xf32, #tpu.memory_space<vmem>>, vector<32x1xf32>
    %4 = vector.broadcast %3 : vector<32x1xf32> to vector<32x128xf32>
    %5 = arith.addf %2, %4 : vector<32x128xf32>
    %cst_5 = arith.constant 0.000000e+00 : f32
    %6 = vector.broadcast %cst_5 : f32 to vector<32x128xf32>
    %7 = arith.maximumf %5, %6 : vector<32x128xf32>
    %c0_6 = arith.constant 0 : index
    %c0_7 = arith.constant 0 : index
    %8 = vector.load %arg4[%c0_6, %c0_7] : memref<32x32xf32, #tpu.memory_space<vmem>>, vector<32x32xf32>
    %cst_8 = arith.constant dense<0.000000e+00> : vector<32x128xf32>
    %9 = tpu.matmul %8, %7, %cst_8 {dimension_numbers = #tpu.dot_dimension_numbers<[1], [0], [0], [1], [0, 0, 1, 1], [], []>} : vector<32x32xf32>, vector<32x128xf32>, vector<32x128xf32> -> vector<32x128xf32>
    %c0_9 = arith.constant 0 : index
    %c0_10 = arith.constant 0 : index
    %10 = vector.load %arg5[%c0_9, %c0_10] : memref<32x1xf32, #tpu.memory_space<vmem>>, vector<32x1xf32>
    %11 = vector.broadcast %10 : vector<32x1xf32> to vector<32x128xf32>
    %12 = arith.addf %9, %11 : vector<32x128xf32>
    %cst_11 = arith.constant 0.000000e+00 : f32
    %13 = vector.broadcast %cst_11 : f32 to vector<32x128xf32>
    %14 = arith.maximumf %12, %13 : vector<32x128xf32>
    %c0_12 = arith.constant 0 : index
    %c0_13 = arith.constant 0 : index
    %15 = vector.load %arg6[%c0_12, %c0_13] : memref<32x32xf32, #tpu.memory_space<vmem>>, vector<32x32xf32>
    %cst_14 = arith.constant dense<0.000000e+00> : vector<32x128xf32>
    %16 = tpu.matmul %15, %14, %cst_14 {dimension_numbers = #tpu.dot_dimension_numbers<[1], [0], [0], [1], [0, 0, 1, 1], [], []>} : vector<32x32xf32>, vector<32x128xf32>, vector<32x128xf32> -> vector<32x128xf32>
    %c0_15 = arith.constant 0 : index
    %c0_16 = arith.constant 0 : index
    %17 = vector.load %arg7[%c0_15, %c0_16] : memref<32x1xf32, #tpu.memory_space<vmem>>, vector<32x1xf32>
    %18 = vector.broadcast %17 : vector<32x1xf32> to vector<32x128xf32>
    %19 = arith.addf %16, %18 : vector<32x128xf32>
    %cst_17 = arith.constant 0.000000e+00 : f32
    %20 = vector.broadcast %cst_17 : f32 to vector<32x128xf32>
    %21 = arith.maximumf %19, %20 : vector<32x128xf32>
    %c0_18 = arith.constant 0 : index
    %c0_19 = arith.constant 0 : index
    %22 = vector.load %arg8[%c0_18, %c0_19] : memref<8x32xf32, #tpu.memory_space<vmem>>, vector<8x32xf32>
    %cst_20 = arith.constant dense<0.000000e+00> : vector<8x128xf32>
    %23 = tpu.matmul %22, %21, %cst_20 {dimension_numbers = #tpu.dot_dimension_numbers<[1], [0], [0], [1], [0, 0, 1, 1], [], []>} : vector<8x32xf32>, vector<32x128xf32>, vector<8x128xf32> -> vector<8x128xf32>
    %c0_21 = arith.constant 0 : index
    %c0_22 = arith.constant 0 : index
    %24 = vector.load %arg9[%c0_21, %c0_22] : memref<8x1xf32, #tpu.memory_space<vmem>>, vector<8x1xf32>
    %25 = vector.broadcast %24 : vector<8x1xf32> to vector<8x128xf32>
    %26 = arith.addf %23, %25 : vector<8x128xf32>
    %c0_23 = arith.constant 0 : index
    %c0_24 = arith.constant 0 : index
    %27 = vector.load %arg10[%c0_23, %c0_24] : memref<8x128xf32, #tpu.memory_space<vmem>>, vector<8x128xf32>
    tpu.vector_store %arg10[%c0_23, %c0_24], %26 {strides = array<i32>} : memref<8x128xf32, #tpu.memory_space<vmem>>, vector<8x128xf32>,
    return
  }
  func.func @transform_0(%arg0: i32) -> (i32, i32) {
    %c0_i32 = arith.constant 0 : i32
    %c0_i32_0 = arith.constant 0 : i32
    return %c0_i32, %arg0 : i32, i32
  }
  func.func @transform_1(%arg0: i32) -> (i32, i32) {
    %c0_i32 = arith.constant 0 : i32
    %c0_i32_0 = arith.constant 0 : i32
    %c0_i32_1 = arith.constant 0 : i32
    return %c0_i32, %c0_i32_0 : i32, i32
  }
  func.func @transform_2(%arg0: i32) -> (i32, i32) {
    %c0_i32 = arith.constant 0 : i32
    %c0_i32_0 = arith.constant 0 : i32
    %c0_i32_1 = arith.constant 0 : i32
    return %c0_i32, %c0_i32_0 : i32, i32
  }
  func.func @transform_3(%arg0: i32) -> (i32, i32) {
    %c0_i32 = arith.constant 0 : i32
    %c0_i32_0 = arith.constant 0 : i32
    %c0_i32_1 = arith.constant 0 : i32
    return %c0_i32, %c0_i32_0 : i32, i32
  }
  func.func @transform_4(%arg0: i32) -> (i32, i32) {
    %c0_i32 = arith.constant 0 : i32
    %c0_i32_0 = arith.constant 0 : i32
    %c0_i32_1 = arith.constant 0 : i32
    return %c0_i32, %c0_i32_0 : i32, i32
  }
  func.func @transform_5(%arg0: i32) -> (i32, i32) {
    %c0_i32 = arith.constant 0 : i32
    %c0_i32_0 = arith.constant 0 : i32
    %c0_i32_1 = arith.constant 0 : i32
    return %c0_i32, %c0_i32_0 : i32, i32
  }
  func.func @transform_6(%arg0: i32) -> (i32, i32) {
    %c0_i32 = arith.constant 0 : i32
    %c0_i32_0 = arith.constant 0 : i32
    %c0_i32_1 = arith.constant 0 : i32
    return %c0_i32, %c0_i32_0 : i32, i32
  }
  func.func @transform_7(%arg0: i32) -> (i32, i32) {
    %c0_i32 = arith.constant 0 : i32
    %c0_i32_0 = arith.constant 0 : i32
    %c0_i32_1 = arith.constant 0 : i32
    return %c0_i32, %c0_i32_0 : i32, i32
  }
  func.func @transform_8(%arg0: i32) -> (i32, i32) {
    %c0_i32 = arith.constant 0 : i32
    %c0_i32_0 = arith.constant 0 : i32
    %c0_i32_1 = arith.constant 0 : i32
    return %c0_i32, %c0_i32_0 : i32, i32
  }
  func.func @transform_9(%arg0: i32) -> (i32, i32) {
    %c0_i32 = arith.constant 0 : i32
    %c0_i32_0 = arith.constant 0 : i32
    return %c0_i32, %arg0 : i32, i32
  }
}

</mosaic_0001>

<llo_original>
// kernel: tpu_custom_call.1
$region0: #{tpu_custom_call.1}
  #allocation0 [shape = 'u32[]', space=smem, size = 0x4, offset = 0x4, fixed_abs, tag = 'smem constant byte address 0x4 - core index']
  #allocation1 [shape = 'u32[144,128]{1,0:T(1,128)}', space=vmem, size = 0x12000, scoped, tag = 'internal scratch']
  %s0 = inlined_call_operand.vmem [shape: f32[16,128], index: 0, kind: input, shape index: {}]
  %s1 = inlined_call_operand.vmem [shape: f32[32,16], index: 1, kind: input, shape index: {}]
  %s2 = inlined_call_operand.vmem [shape: f32[32,1], index: 2, kind: input, shape index: {}]
  %s3 = inlined_call_operand.vmem [shape: f32[32,32], index: 3, kind: input, shape index: {}]
  %s4 = inlined_call_operand.vmem [shape: f32[32,1], index: 4, kind: input, shape index: {}]
  %s5 = inlined_call_operand.vmem [shape: f32[32,32], index: 5, kind: input, shape index: {}]
  %s6 = inlined_call_operand.vmem [shape: f32[32,1], index: 6, kind: input, shape index: {}]
  %s7 = inlined_call_operand.vmem [shape: f32[8,32], index: 7, kind: input, shape index: {}]
  %s8 = inlined_call_operand.vmem [shape: f32[8,1], index: 8, kind: input, shape index: {}]
  %s9 = inlined_call_operand.hbm [shape: f32[8,128], index: 9, kind: output, shape index: {}]
  %s10 = sld [smem:[#allocation0]]
  $region46: #{tpu_custom_call.1} parent=0
    _
  %s12 = ssub.s32 1, %s10
  %s13 = scalar_select 0, %s12, %s10
  $region1: #{tpu_custom_call.1} parent=0
    #allocation2 [shape = 'u8[4096]{0}', space=vmem, size = 0x1000, scoped, tag = 'output window, operand 0, single buffered']
    #allocation3 [shape = 's32[1]{0}', space=sflag, size = 0x4, scoped, tag = 'scoped memory for tpu_custom_call.1']
    %14 = vsyncpa [#allocation3], 0
    // Predicated region
    $region2: #{tpu_custom_call.1} parent=1 // pred_check
      _
    $region3: #{tpu_custom_call.1} parent=1 // pred_check_branch
      %16 = sbr.rel (0) target = $region5
    $region4: #{tpu_custom_call.1} parent=1 // pred_region
      _
    $region5: #{tpu_custom_call.1} parent=1 // pred_fallthru
      _
    // Predicated region
    $region6: #{tpu_custom_call.1} parent=1 // pred_check
      _
    $region7: #{tpu_custom_call.1} parent=1 // pred_check_branch
      %18 = sbr.rel (0) target = $region9
    $region8: #{tpu_custom_call.1} parent=1 // pred_region
      _
    $region9: #{tpu_custom_call.1} parent=1 // pred_fallthru
      _
    // Predicated region
    $region10: #{tpu_custom_call.1} parent=1 // pred_check
      _
    $region11: #{tpu_custom_call.1} parent=1 // pred_check_branch
      %20 = sbr.rel (0) target = $region13
    $region12: #{tpu_custom_call.1} parent=1 // pred_region
      _
    $region13: #{tpu_custom_call.1} parent=1 // pred_fallthru
      _
    // Predicated region
    $region14: #{tpu_custom_call.1} parent=1 // pred_check
      _
    $region15: #{tpu_custom_call.1} parent=1 // pred_check_branch
      %22 = sbr.rel (0) target = $region17
    $region16: #{tpu_custom_call.1} parent=1 // pred_region
      _
    $region17: #{tpu_custom_call.1} parent=1 // pred_fallthru
      _
    // Predicated region
    $region18: #{tpu_custom_call.1} parent=1 // pred_check
      _
    $region19: #{tpu_custom_call.1} parent=1 // pred_check_branch
      %24 = sbr.rel (0) target = $region21
    $region20: #{tpu_custom_call.1} parent=1 // pred_region
      _
    $region21: #{tpu_custom_call.1} parent=1 // pred_fallthru
      _
    // Predicated region
    $region22: #{tpu_custom_call.1} parent=1 // pred_check
      _
    $region23: #{tpu_custom_call.1} parent=1 // pred_check_branch
      %26 = sbr.rel (0) target = $region25
    $region24: #{tpu_custom_call.1} parent=1 // pred_region
      _
    $region25: #{tpu_custom_call.1} parent=1 // pred_fallthru
      _
    // Predicated region
    $region26: #{tpu_custom_call.1} parent=1 // pred_check
      _
    $region27: #{tpu_custom_call.1} parent=1 // pred_check_branch
      %28 = sbr.rel (0) target = $region29
    $region28: #{tpu_custom_call.1} parent=1 // pred_region
      _
    $region29: #{tpu_custom_call.1} parent=1 // pred_fallthru
      _
    // Predicated region
    $region30: #{tpu_custom_call.1} parent=1 // pred_check
      _
    $region31: #{tpu_custom_call.1} parent=1 // pred_check_branch
      %30 = sbr.rel (0) target = $region33
    $region32: #{tpu_custom_call.1} parent=1 // pred_region
      _
    $region33: #{tpu_custom_call.1} parent=1 // pred_fallthru
      _
    // Predicated region
    $region34: #{tpu_custom_call.1} parent=1 // pred_check
      _
    $region35: #{tpu_custom_call.1} parent=1 // pred_check_branch
      %32 = sbr.rel (0) target = $region37
    $region36: #{tpu_custom_call.1} parent=1 // pred_region
      _
    $region37: #{tpu_custom_call.1} parent=1 // pred_fallthru
      _
    %v33 = vld [vmem:[%s0] sm:$0xff]
    %v34 = vld [vmem:[%s0 + $0x8] sm:$0xff]
    %v35 = vld [vmem:[%s1] sm:$0xff]
    %v36 = vld [vmem:[%s1 + $0x8] sm:$0xff]
    %v37 = vld [vmem:[%s1 + $0x10] sm:$0xff]
    %v38 = vld [vmem:[%s1 + $0x18] sm:$0xff]
    %v39 = vld [vmem:[%s2] sm:$0xff]
    %v40 = vld [vmem:[%s2 + $0x8] sm:$0xff]
    %v41 = vld [vmem:[%s2 + $0x10] sm:$0xff]
    %v42 = vld [vmem:[%s2 + $0x18] sm:$0xff]
    %44 = vset.pattern.permute.xlu0 0
    %45 = vperm.xlu0 %44, %v39
    %v46 = vpop.permute.xlu0 %45
    %49 = vset.pattern.permute.xlu0 0
    %50 = vperm.xlu0 %49, %v40
    %v51 = vpop.permute.xlu0 %50
    %54 = vset.pattern.permute.xlu0 0
    %55 = vperm.xlu0 %54, %v41
    %v56 = vpop.permute.xlu0 %55
    %59 = vset.pattern.permute.xlu0 0
    %60 = vperm.xlu0 %59, %v42
    %v61 = vpop.permute.xlu0 %60
    %vm63 = vcmask 130048
    %v65 = vsel %vm63, %v35, 0
    %v68 = vsel %vm63, %v36, 0
    %v71 = vsel %vm63, %v37, 0
    %v74 = vsel %vm63, %v38, 0
    %76 = vmatprep.subr.mxu0 0.0
    %77 = vmatpush1.msra.mxu0 %v33
    %78 = vmatprep.subr.mxu0 0.0
    %79 = vmatpush1.msra.mxu0 %v34
    %80 = vmatprep.subr.mxu0 0.0
    %81 = vmatpush1.msra.mxu0 0.0
    %82 = vmatprep.subr.mxu0 0.0
    %83 = vmatpush1.msra.mxu0 0.0
    %84 = vmatprep.subr.mxu0 0.0
    %85 = vmatpush1.msra.mxu0 0.0
    %86 = vmatprep.subr.mxu0 0.0
    %87 = vmatpush1.msra.mxu0 0.0
    %88 = vmatprep.subr.mxu0 0.0
    %89 = vmatpush1.msra.mxu0 0.0
    %90 = vmatprep.subr.mxu0 0.0
    %91 = vmatpush1.msra.mxu0 0.0
    %92 = vmatprep.subr.mxu0 0.0
    %93 = vmatpush1.msra.mxu0 0.0
    %94 = vmatprep.subr.mxu0 0.0
    %95 = vmatpush1.msra.mxu0 0.0
    %96 = vmatprep.subr.mxu0 0.0
    %97 = vmatpush1.msra.mxu0 0.0
    %98 = vmatprep.subr.mxu0 0.0
    %99 = vmatpush1.msra.mxu0 0.0
    %100 = vmatprep.subr.mxu0 0.0
    %101 = vmatpush1.msra.mxu0 0.0
    %102 = vmatprep.subr.mxu0 0.0
    %103 = vmatpush1.msra.mxu0 0.0
    %104 = vmatprep.subr.mxu0 0.0
    %105 = vmatpush1.msra.mxu0 0.0
    %106 = vmatprep.subr.mxu0 0.0
    %107 = vmatpush1.msra.mxu0 0.0
    %108 = vmatprep.subr.mxu0 0.0
    %109 = vmatpush1.msra.mxu0 0.0
    %110 = vmatprep.subr.mxu0 0.0
    %111 = vmatpush1.msra.mxu0 0.0
    %112 = vmatprep.subr.mxu0 0.0
    %113 = vmatpush1.msra.mxu0 0.0
    %114 = vmatprep.subr.mxu0 0.0
    %115 = vmatpush1.msra.mxu0 0.0
    %116 = vmatprep.subr.mxu0 0.0
    %117 = vmatpush1.msra.mxu0 0.0
    %118 = vmatprep.subr.mxu0 0.0
    %119 = vmatpush1.msra.mxu0 0.0
    %120 = vmatprep.subr.mxu0 0.0
    %121 = vmatpush1.msra.mxu0 0.0
    %122 = vmatprep.subr.mxu0 0.0
    %123 = vmatpush1.msra.mxu0 0.0
    %124 = vmatprep.subr.mxu0 0.0
    %125 = vmatpush1.msra.mxu0 0.0
    %126 = vmatprep.subr.mxu0 0.0
    %127 = vmatpush1.msra.mxu0 0.0
    %128 = vmatprep.subr.mxu0 0.0
    %129 = vmatpush1.msra.mxu0 0.0
    %130 = vmatprep.subr.mxu0 0.0
    %131 = vmatpush1.msra.mxu0 0.0
    %132 = vmatprep.subr.mxu0 0.0
    %133 = vmatpush1.msra.mxu0 0.0
    %134 = vmatprep.subr.mxu0 0.0
    %135 = vmatpush1.msra.mxu0 0.0
    %136 = vmatprep.subr.mxu0 0.0
    %137 = vmatpush1.msra.mxu0 0.0
    %138 = vmatprep.subr.mxu0 0.0
    %139 = vmatpush1.msra.mxu0 0.0
    %140 = vmatprep.mubr.f32.mxu0 0.0
    %141 = vmatmul.mubr.f32.gmra.mrb[0].mxu0 %v65
    %v142 = vpop.f32.mrb[0].mxu0
    %v143 = vadd.f32 %v46, %v142
    %v144 = vpop.f32.mrb[0].mxu0
    %145 = vmatprep.mubr.f32.mxu0 0.0
    %146 = vmatmul.mubr.f32.gmra.mrb[0].mxu0 %v68
    %v147 = vpop.f32.mrb[0].mxu0
    %v148 = vadd.f32 %v51, %v147
    %v149 = vpop.f32.mrb[0].mxu0
    %150 = vmatprep.mubr.f32.mxu0 0.0
    %151 = vmatmul.mubr.f32.gmra.mrb[0].mxu0 %v71
    %v152 = vpop.f32.mrb[0].mxu0
    %v153 = vadd.f32 %v56, %v152
    %v154 = vpop.f32.mrb[0].mxu0
    %155 = vmatprep.mubr.f32.mxu0 0.0
    %156 = vmatmul.mubr.f32.gmra.mrb[0].mxu0 %v74
    %v157 = vpop.f32.mrb[0].mxu0
    %v158 = vadd.f32 %v61, %v157
    %v159 = vpop.f32.mrb[0].mxu0
    %160 = vdwg.mxu0
    %v161 = vmax.f32 %v143, 0.0
    %v162 = vmax.f32 %v148, 0.0
    %v163 = vmax.f32 %v153, 0.0
    %v164 = vmax.f32 %v158, 0.0
    %v165 = vld [vmem:[%s3] sm:$0xff]
    %v166 = vld [vmem:[%s3 + $0x8] sm:$0xff]
    %v167 = vld [vmem:[%s3 + $0x10] sm:$0xff]
    %v168 = vld [vmem:[%s3 + $0x18] sm:$0xff]
    %v169 = vld [vmem:[%s4] sm:$0xff]
    %v170 = vld [vmem:[%s4 + $0x8] sm:$0xff]
    %v171 = vld [vmem:[%s4 + $0x10] sm:$0xff]
    %v172 = vld [vmem:[%s4 + $0x18] sm:$0xff]
    %174 = vset.pattern.permute.xlu0 0
    %175 = vperm.xlu0 %174, %v169
    %v176 = vpop.permute.xlu0 %175
    %179 = vset.pattern.permute.xlu0 0
    %180 = vperm.xlu0 %179, %v170
    %v181 = vpop.permute.xlu0 %180
    %184 = vset.pattern.permute.xlu0 0
    %185 = vperm.xlu0 %184, %v171
    %v186 = vpop.permute.xlu0 %185
    %189 = vset.pattern.permute.xlu0 0
    %190 = vperm.xlu0 %189, %v172
    %v191 = vpop.permute.xlu0 %190
    %vm193 = vcmask 261120
    %v195 = vsel %vm193, %v165, 0
    %v198 = vsel %vm193, %v166, 0
    %v201 = vsel %vm193, %v167, 0
    %v204 = vsel %vm193, %v168, 0
    %206 = vmatprep.subr.mxu0 0.0
    %207 = vmatpush1.msra.mxu0 %v161
    %208 = vmatprep.subr.mxu0 0.0
    %209 = vmatpush1.msra.mxu0 %v162
    %210 = vmatprep.subr.mxu0 0.0
    %211 = vmatpush1.msra.mxu0 %v163
    %212 = vmatprep.subr.mxu0 0.0
    %213 = vmatpush1.msra.mxu0 %v164
    %214 = vmatprep.subr.mxu0 0.0
    %215 = vmatpush1.msra.mxu0 0.0
    %216 = vmatprep.subr.mxu0 0.0
    %217 = vmatpush1.msra.mxu0 0.0
    %218 = vmatprep.subr.mxu0 0.0
    %219 = vmatpush1.msra.mxu0 0.0
    %220 = vmatprep.subr.mxu0 0.0
    %221 = vmatpush1.msra.mxu0 0.0
    %222 = vmatprep.subr.mxu0 0.0
    %223 = vmatpush1.msra.mxu0 0.0
    %224 = vmatprep.subr.mxu0 0.0
    %225 = vmatpush1.msra.mxu0 0.0
    %226 = vmatprep.subr.mxu0 0.0
    %227 = vmatpush1.msra.mxu0 0.0
    %228 = vmatprep.subr.mxu0 0.0
    %229 = vmatpush1.msra.mxu0 0.0
    %230 = vmatprep.subr.mxu0 0.0
    %231 = vmatpush1.msra.mxu0 0.0
    %232 = vmatprep.subr.mxu0 0.0
    %233 = vmatpush1.msra.mxu0 0.0
    %234 = vmatprep.subr.mxu0 0.0
    %235 = vmatpush1.msra.mxu0 0.0
    %236 = vmatprep.subr.mxu0 0.0
    %237 = vmatpush1.msra.mxu0 0.0
    %238 = vmatprep.subr.mxu0 0.0
    %239 = vmatpush1.msra.mxu0 0.0
    %240 = vmatprep.subr.mxu0 0.0
    %241 = vmatpush1.msra.mxu0 0.0
    %242 = vmatprep.subr.mxu0 0.0
    %243 = vmatpush1.msra.mxu0 0.0
    %244 = vmatprep.subr.mxu0 0.0
    %245 = vmatpush1.msra.mxu0 0.0
    %246 = vmatprep.subr.mxu0 0.0
    %247 = vmatpush1.msra.mxu0 0.0
    %248 = vmatprep.subr.mxu0 0.0
    %249 = vmatpush1.msra.mxu0 0.0
    %250 = vmatprep.subr.mxu0 0.0
    %251 = vmatpush1.msra.mxu0 0.0
    %252 = vmatprep.subr.mxu0 0.0
    %253 = vmatpush1.msra.mxu0 0.0
    %254 = vmatprep.subr.mxu0 0.0
    %255 = vmatpush1.msra.mxu0 0.0
    %256 = vmatprep.subr.mxu0 0.0
    %257 = vmatpush1.msra.mxu0 0.0
    %258 = vmatprep.subr.mxu0 0.0
    %259 = vmatpush1.msra.mxu0 0.0
    %260 = vmatprep.subr.mxu0 0.0
    %261 = vmatpush1.msra.mxu0 0.0
    %262 = vmatprep.subr.mxu0 0.0
    %263 = vmatpush1.msra.mxu0 0.0
    %264 = vmatprep.subr.mxu0 0.0
    %265 = vmatpush1.msra.mxu0 0.0
    %266 = vmatprep.subr.mxu0 0.0
    %267 = vmatpush1.msra.mxu0 0.0
    %268 = vmatprep.subr.mxu0 0.0
    %269 = vmatpush1.msra.mxu0 0.0
    %270 = vmatprep.mubr.f32.mxu0 0.0
    %271 = vmatmul.mubr.f32.gmra.mrb[0].mxu0 %v195
    %v272 = vpop.f32.mrb[0].mxu0
    %v273 = vadd.f32 %v176, %v272
    %v274 = vpop.f32.mrb[0].mxu0
    %275 = vmatprep.mubr.f32.mxu0 0.0
    %276 = vmatmul.mubr.f32.gmra.mrb[0].mxu0 %v198
    %v277 = vpop.f32.mrb[0].mxu0
    %v278 = vadd.f32 %v181, %v277
    %v279 = vpop.f32.mrb[0].mxu0
    %280 = vmatprep.mubr.f32.mxu0 0.0
    %281 = vmatmul.mubr.f32.gmra.mrb[0].mxu0 %v201
    %v282 = vpop.f32.mrb[0].mxu0
    %v283 = vadd.f32 %v186, %v282
    %v284 = vpop.f32.mrb[0].mxu0
    %285 = vmatprep.mubr.f32.mxu0 0.0
    %286 = vmatmul.mubr.f32.gmra.mrb[0].mxu0 %v204
    %v287 = vpop.f32.mrb[0].mxu0
    %v288 = vadd.f32 %v191, %v287
    %v289 = vpop.f32.mrb[0].mxu0
    %290 = vdwg.mxu0
    %v291 = vmax.f32 %v273, 0.0
    %v292 = vmax.f32 %v278, 0.0
    %v293 = vmax.f32 %v283, 0.0
    %v294 = vmax.f32 %v288, 0.0
    %v295 = vld [vmem:[%s5] sm:$0xff]
    %v296 = vld [vmem:[%s5 + $0x8] sm:$0xff]
    %v297 = vld [vmem:[%s5 + $0x10] sm:$0xff]
    %v298 = vld [vmem:[%s5 + $0x18] sm:$0xff]
    %v299 = vld [vmem:[%s6] sm:$0xff]
    %v300 = vld [vmem:[%s6 + $0x8] sm:$0xff]
    %v301 = vld [vmem:[%s6 + $0x10] sm:$0xff]
    %v302 = vld [vmem:[%s6 + $0x18] sm:$0xff]
    %304 = vset.pattern.permute.xlu0 0
    %305 = vperm.xlu0 %304, %v299
    %v306 = vpop.permute.xlu0 %305
    %309 = vset.pattern.permute.xlu0 0
    %310 = vperm.xlu0 %309, %v300
    %v311 = vpop.permute.xlu0 %310
    %314 = vset.pattern.permute.xlu0 0
    %315 = vperm.xlu0 %314, %v301
    %v316 = vpop.permute.xlu0 %315
    %319 = vset.pattern.permute.xlu0 0
    %320 = vperm.xlu0 %319, %v302
    %v321 = vpop.permute.xlu0 %320
    %v324 = vsel %vm193, %v295, 0
    %v327 = vsel %vm193, %v296, 0
    %v330 = vsel %vm193, %v297, 0
    %v333 = vsel %vm193, %v298, 0
    %335 = vmatprep.subr.mxu0 0.0
    %336 = vmatpush1.msra.mxu0 %v291
    %337 = vmatprep.subr.mxu0 0.0
    %338 = vmatpush1.msra.mxu0 %v292
    %339 = vmatprep.subr.mxu0 0.0
    %340 = vmatpush1.msra.mxu0 %v293
    %341 = vmatprep.subr.mxu0 0.0
    %342 = vmatpush1.msra.mxu0 %v294
    %343 = vmatprep.subr.mxu0 0.0
    %344 = vmatpush1.msra.mxu0 0.0
    %345 = vmatprep.subr.mxu0 0.0
    %346 = vmatpush1.msra.mxu0 0.0
    %347 = vmatprep.subr.mxu0 0.0
    %348 = vmatpush1.msra.mxu0 0.0
    %349 = vmatprep.subr.mxu0 0.0
    %350 = vmatpush1.msra.mxu0 0.0
    %351 = vmatprep.subr.mxu0 0.0
    %352 = vmatpush1.msra.mxu0 0.0
    %353 = vmatprep.subr.mxu0 0.0
    %354 = vmatpush1.msra.mxu0 0.0
    %355 = vmatprep.subr.mxu0 0.0
    %356 = vmatpush1.msra.mxu0 0.0
    %357 = vmatprep.subr.mxu0 0.0
    %358 = vmatpush1.msra.mxu0 0.0
    %359 = vmatprep.subr.mxu0 0.0
    %360 = vmatpush1.msra.mxu0 0.0
    %361 = vmatprep.subr.mxu0 0.0
    %362 = vmatpush1.msra.mxu0 0.0
    %363 = vmatprep.subr.mxu0 0.0
    %364 = vmatpush1.msra.mxu0 0.0
    %365 = vmatprep.subr.mxu0 0.0
    %366 = vmatpush1.msra.mxu0 0.0
    %367 = vmatprep.subr.mxu0 0.0
    %368 = vmatpush1.msra.mxu0 0.0
    %369 = vmatprep.subr.mxu0 0.0
    %370 = vmatpush1.msra.mxu0 0.0
    %371 = vmatprep.subr.mxu0 0.0
    %372 = vmatpush1.msra.mxu0 0.0
    %373 = vmatprep.subr.mxu0 0.0
    %374 = vmatpush1.msra.mxu0 0.0
    %375 = vmatprep.subr.mxu0 0.0
    %376 = vmatpush1.msra.mxu0 0.0
    %377 = vmatprep.subr.mxu0 0.0
    %378 = vmatpush1.msra.mxu0 0.0
    %379 = vmatprep.subr.mxu0 0.0
    %380 = vmatpush1.msra.mxu0 0.0
    %381 = vmatprep.subr.mxu0 0.0
    %382 = vmatpush1.msra.mxu0 0.0
    %383 = vmatprep.subr.mxu0 0.0
    %384 = vmatpush1.msra.mxu0 0.0
    %385 = vmatprep.subr.mxu0 0.0
    %386 = vmatpush1.msra.mxu0 0.0
    %387 = vmatprep.subr.mxu0 0.0
    %388 = vmatpush1.msra.mxu0 0.0
    %389 = vmatprep.subr.mxu0 0.0
    %390 = vmatpush1.msra.mxu0 0.0
    %391 = vmatprep.subr.mxu0 0.0
    %392 = vmatpush1.msra.mxu0 0.0
    %393 = vmatprep.subr.mxu0 0.0
    %394 = vmatpush1.msra.mxu0 0.0
    %395 = vmatprep.subr.mxu0 0.0
    %396 = vmatpush1.msra.mxu0 0.0
    %397 = vmatprep.subr.mxu0 0.0
    %398 = vmatpush1.msra.mxu0 0.0
    %399 = vmatprep.mubr.f32.mxu0 0.0
    %400 = vmatmul.mubr.f32.gmra.mrb[0].mxu0 %v324
    %v401 = vpop.f32.mrb[0].mxu0
    %v402 = vadd.f32 %v306, %v401
    %v403 = vpop.f32.mrb[0].mxu0
    %404 = vmatprep.mubr.f32.mxu0 0.0
    %405 = vmatmul.mubr.f32.gmra.mrb[0].mxu0 %v327
    %v406 = vpop.f32.mrb[0].mxu0
    %v407 = vadd.f32 %v311, %v406
    %v408 = vpop.f32.mrb[0].mxu0
    %409 = vmatprep.mubr.f32.mxu0 0.0
    %410 = vmatmul.mubr.f32.gmra.mrb[0].mxu0 %v330
    %v411 = vpop.f32.mrb[0].mxu0
    %v412 = vadd.f32 %v316, %v411
    %v413 = vpop.f32.mrb[0].mxu0
    %414 = vmatprep.mubr.f32.mxu0 0.0
    %415 = vmatmul.mubr.f32.gmra.mrb[0].mxu0 %v333
    %v416 = vpop.f32.mrb[0].mxu0
    %v417 = vadd.f32 %v321, %v416
    %v418 = vpop.f32.mrb[0].mxu0
    %419 = vdwg.mxu0
    %v420 = vmax.f32 %v402, 0.0
    %v421 = vmax.f32 %v407, 0.0
    %v422 = vmax.f32 %v412, 0.0
    %v423 = vmax.f32 %v417, 0.0
    %v424 = vld [vmem:[%s7] sm:$0xff]
    %v425 = vld [vmem:[%s8] sm:$0xff]
    %427 = vset.pattern.permute.xlu0 0
    %428 = vperm.xlu0 %427, %v425
    %v429 = vpop.permute.xlu0 %428
    %v432 = vsel %vm193, %v424, 0
    %434 = vmatprep.subr.mxu0 0.0
    %435 = vmatpush1.msra.mxu0 %v420
    %436 = vmatprep.subr.mxu0 0.0
    %437 = vmatpush1.msra.mxu0 %v421
    %438 = vmatprep.subr.mxu0 0.0
    %439 = vmatpush1.msra.mxu0 %v422
    %440 = vmatprep.subr.mxu0 0.0
    %441 = vmatpush1.msra.mxu0 %v423
    %442 = vmatprep.subr.mxu0 0.0
    %443 = vmatpush1.msra.mxu0 0.0
    %444 = vmatprep.subr.mxu0 0.0
    %445 = vmatpush1.msra.mxu0 0.0
    %446 = vmatprep.subr.mxu0 0.0
    %447 = vmatpush1.msra.mxu0 0.0
    %448 = vmatprep.subr.mxu0 0.0
    %449 = vmatpush1.msra.mxu0 0.0
    %450 = vmatprep.subr.mxu0 0.0
    %451 = vmatpush1.msra.mxu0 0.0
    %452 = vmatprep.subr.mxu0 0.0
    %453 = vmatpush1.msra.mxu0 0.0
    %454 = vmatprep.subr.mxu0 0.0
    %455 = vmatpush1.msra.mxu0 0.0
    %456 = vmatprep.subr.mxu0 0.0
    %457 = vmatpush1.msra.mxu0 0.0
    %458 = vmatprep.subr.mxu0 0.0
    %459 = vmatpush1.msra.mxu0 0.0
    %460 = vmatprep.subr.mxu0 0.0
    %461 = vmatpush1.msra.mxu0 0.0
    %462 = vmatprep.subr.mxu0 0.0
    %463 = vmatpush1.msra.mxu0 0.0
    %464 = vmatprep.subr.mxu0 0.0
    %465 = vmatpush1.msra.mxu0 0.0
    %466 = vmatprep.subr.mxu0 0.0
    %467 = vmatpush1.msra.mxu0 0.0
    %468 = vmatprep.subr.mxu0 0.0
    %469 = vmatpush1.msra.mxu0 0.0
    %470 = vmatprep.subr.mxu0 0.0
    %471 = vmatpush1.msra.mxu0 0.0
    %472 = vmatprep.subr.mxu0 0.0
    %473 = vmatpush1.msra.mxu0 0.0
    %474 = vmatprep.subr.mxu0 0.0
    %475 = vmatpush1.msra.mxu0 0.0
    %476 = vmatprep.subr.mxu0 0.0
    %477 = vmatpush1.msra.mxu0 0.0
    %478 = vmatprep.subr.mxu0 0.0
    %479 = vmatpush1.msra.mxu0 0.0
    %480 = vmatprep.subr.mxu0 0.0
    %481 = vmatpush1.msra.mxu0 0.0
    %482 = vmatprep.subr.mxu0 0.0
    %483 = vmatpush1.msra.mxu0 0.0
    %484 = vmatprep.subr.mxu0 0.0
    %485 = vmatpush1.msra.mxu0 0.0
    %486 = vmatprep.subr.mxu0 0.0
    %487 = vmatpush1.msra.mxu0 0.0
    %488 = vmatprep.subr.mxu0 0.0
    %489 = vmatpush1.msra.mxu0 0.0
    %490 = vmatprep.subr.mxu0 0.0
    %491 = vmatpush1.msra.mxu0 0.0
    %492 = vmatprep.subr.mxu0 0.0
    %493 = vmatpush1.msra.mxu0 0.0
    %494 = vmatprep.subr.mxu0 0.0
    %495 = vmatpush1.msra.mxu0 0.0
    %496 = vmatprep.subr.mxu0 0.0
    %497 = vmatpush1.msra.mxu0 0.0
    %498 = vmatprep.mubr.f32.mxu0 0.0
    %499 = vmatmul.mubr.f32.gmra.mrb[0].mxu0 %v432
    %v500 = vpop.f32.mrb[0].mxu0
    %v501 = vadd.f32 %v429, %v500
    %v502 = vpop.f32.mrb[0].mxu0
    %503 = vdwg.mxu0
    %504 = vst [vmem:[#allocation2] sm:$0xff] %v501
    // Predicated region
    $region38: #{tpu_custom_call.1} parent=1 // pred_check
      _
    $region39: #{tpu_custom_call.1} parent=1 // pred_check_branch
      %506 = sbr.rel (0) target = $region41
    $region40: #{tpu_custom_call.1} parent=1 // pred_region
      %s508 = ssub.s32 128, 128
      %509 = vsyncadd [#allocation3], %s508
      %s511 = sshll.u32 [#allocation2], 4
      %s512 = int_to_ptr.vmem [resolvable:$true] %s511
      %514 = dma.vmem_to_hbm [thread:$0]  %s512, 128, %s9, [#allocation3]
    $region41: #{tpu_custom_call.1} parent=1 // pred_fallthru
      _
    // Predicated region
    $region42: #{tpu_custom_call.1} parent=1 // pred_check
      _
    $region43: #{tpu_custom_call.1} parent=1 // pred_check_branch
      %516 = sbr.rel (0) target = $region45
    $region44: #{tpu_custom_call.1} parent=1 // pred_region
      %517 = dma.done [#allocation3], 128
    $region45: #{tpu_custom_call.1} parent=1 // pred_fallthru
      _
    %518 = vsyncpa [#allocation3], 1

</llo_original>
